<compile_context>
chip_gen: v6e
topology: v6e:2x2x1
jax: 0.10.0
libtpu: 0.0.40
codegen_flags: <defaults>
</compile_context>

<pallas_src>
import jax
import jax.numpy as jnp
from jax.experimental import pallas as pl
from jax.experimental.pallas import tpu as pltpu


def _cnn_kernel(x_ref, w_ref, b_ref, o_ref):
    """Conv1d (as im2col matmul) + max-over-positions + bias + ReLU.

    x_ref: (bt, C, M)   padded char embeddings, PyTorch NCL layout, f32
    w_ref: (K*C, F)     flattened conv weights, bf16
    b_ref: (1, F)       conv bias, f32
    o_ref: (bt, F)      word embeddings, f32
    """
    bt, C, M = x_ref.shape
    KC, F = w_ref.shape
    K = KC // C
    L = M - K + 1  # valid conv output length

    # Build one 2-D im2col LHS (bt*L, K*C) so the whole block is a single MXU matmul.
    blocks = []
    for b in range(bt):                              # bt is small & static -> unrolled
        xb = x_ref[b].T                              # (C, M) -> (M, C), in-VMEM transpose
        blocks.append(
            jnp.concatenate([xb[k:k + L, :] for k in range(K)], axis=-1))  # (L, K*C)
    lhs = blocks[0] if bt == 1 else jnp.concatenate(blocks, axis=0)        # (bt*L, K*C)

    # Single matmul: bf16 operands, f32 accumulation.
    acc = jnp.dot(lhs.astype(jnp.bfloat16), w_ref[...],
                  preferred_element_type=jnp.float32)                      # (bt*L, F)

    # Global max over conv positions per word, then bias + ReLU (equivalent reorder).
    maxes = [jnp.max(acc[b * L:(b + 1) * L, :], axis=0, keepdims=True)     # (1, F)
             for b in range(bt)]
    m = maxes[0] if bt == 1 else jnp.concatenate(maxes, axis=0)            # (bt, F)
    o_ref[...] = jnp.maximum(m + b_ref[...], 0.0).astype(o_ref.dtype)


def prepare_cnn_params(weight_fck, bias_f):
    """One-time parameter prep (outside the per-call hot path).

    weight_fck: (F, C, K) f32  (nn.Conv1d weight layout)
    bias_f:     (F,)      f32
    returns:    w_flat (K*C, F) bf16, b_2d (1, F) f32
    """
    F, C, K = weight_fck.shape
    w_flat = jnp.transpose(weight_fck, (2, 1, 0)).reshape(K * C, F).astype(jnp.bfloat16)
    b_2d = bias_f.reshape(1, F).astype(jnp.float32)
    return w_flat, b_2d


def cnn_forward(x_ncl, w_flat, b_2d, *, batch_tile=8):
    """x_ncl: (B, C, M) f32 (PyTorch layout); returns (B, F) f32."""
    B, C, M = x_ncl.shape
    KC, F = w_flat.shape
    K = KC // C
    assert KC == K * C, "weight inner dim must be K*C"
    L = M - K + 1
    assert L > 0, "max_word_length must be >= kernel_size"

    bt = min(batch_tile, B)
    pad = (-B) % bt
    if pad:
        x_ncl = jnp.pad(x_ncl, ((0, pad), (0, 0), (0, 0)))
    Bp = B + pad

    out = pl.pallas_call(
        _cnn_kernel,
        out_shape=jax.ShapeDtypeStruct((Bp, F), jnp.float32),
        grid_spec=pltpu.PrefetchScalarGridSpec(
            num_scalar_prefetch=0,
            grid=(Bp // bt,),
            in_specs=[
                pl.BlockSpec((bt, C, M), lambda i: (i, 0, 0)),   # batch tile of words
                pl.BlockSpec((KC, F), lambda i: (0, 0)),         # weight: resident block
                pl.BlockSpec((1, F), lambda i: (0, 0)),          # bias:   resident block
            ],
            out_specs=pl.BlockSpec((bt, F), lambda i: (i, 0)),   # lane-dense (F=256)
        ),
        compiler_params=pltpu.CompilerParams(
            dimension_semantics=("parallel",)),                  # shard batch on v7x
    )(x_ncl, w_flat, b_2d)
    return out[:B] if pad else out


def cnn_reference(x_ncl, weight_fck, bias_f):
    """Pure-JAX reference matching the PyTorch forward (bf16 matmul operands,
    f32 accumulation, to match the kernel's numerics)."""
    B, C, M = x_ncl.shape
    F, _, K = weight_fck.shape
    L = M - K + 1
    x_nlc = jnp.transpose(x_ncl, (0, 2, 1)).astype(jnp.bfloat16)      # (B, M, C)
    w_kcf = jnp.transpose(weight_fck, (2, 1, 0)).astype(jnp.bfloat16)  # (K, C, F)
    acc = jnp.zeros((B, L, F), jnp.float32)
    for k in range(K):
        acc = acc + jnp.einsum("blc,cf->blf", x_nlc[:, k:k + L, :], w_kcf[k],
                               preferred_element_type=jnp.float32)
    acc = acc + bias_f[None, None, :]
    return jnp.max(jnp.maximum(acc, 0.0), axis=1)                      # (B, F)


if __name__ == "__main__":
    # Module defaults: char_embed_size=50, max_word_length=21, kernel_size=5, num_filters=256
    B, C, M, K, F = 2, 50, 21, 5, 256

    key = jax.random.PRNGKey(0)
    kx, kw, kb = jax.random.split(key, 3)

    # Deterministic parameter init (PyTorch Conv1d-style uniform bounds).
    fan_in = C * K
    bound = 1.0 / (fan_in ** 0.5)
    weight = jax.random.uniform(kw, (F, C, K), jnp.float32, -bound, bound)
    bias = jax.random.uniform(kb, (F,), jnp.float32, -bound, bound)
    x = jax.random.normal(kx, (B, C, M), jnp.float32)

    # One-time parameter flattening (out of the per-call hot path).
    w_flat, b_2d = prepare_cnn_params(weight, bias)

    out = jax.block_until_ready(cnn_forward(x, w_flat, b_2d))

    ref = cnn_reference(x, weight, bias)
    assert out.shape == (B, F), out.shape
    assert jnp.allclose(out, ref, atol=2e-2, rtol=2e-2), "mismatch vs reference"

    print("KERNEL_OK")
</pallas_src>

<mosaic_0001>
module attributes {stable_mosaic.version = 11 : i64} {
  func.func @_cnn_kernel(%arg0: i32, %arg1: memref<2x50x21xf32, #tpu.memory_space<vmem>>, %arg2: memref<250x256xbf16, #tpu.memory_space<vmem>>, %arg3: memref<1x256xf32, #tpu.memory_space<vmem>>, %arg4: memref<2x256xf32, #tpu.memory_space<vmem>>) attributes {dimension_semantics = [#tpu.dimension_semantics<parallel>], iteration_bounds = array<i64: 1>, scalar_prefetch = 0 : i64, scratch_operands = 0 : i64, tpu.core_type = #tpu.core_type<tc>, window_params = [{transform_indices = @transform_0, window_bounds = array<i64: 2, 50, 21>}, {pipeline_mode = #tpu.pipeline_mode<synchronous>, transform_indices = @transform_1, window_bounds = array<i64: 250, 256>}, {pipeline_mode = #tpu.pipeline_mode<synchronous>, transform_indices = @transform_2, window_bounds = array<i64: 1, 256>}, {transform_indices = @transform_3, window_bounds = array<i64: 2, 256>}]} {
    %c0 = arith.constant 0 : index
    %c0_0 = arith.constant 0 : index
    %c0_1 = arith.constant 0 : index
    %0 = vector.load %arg1[%c0, %c0_0, %c0_1] : memref<2x50x21xf32, #tpu.memory_space<vmem>>, vector<1x50x21xf32>
    %1 = vector.shape_cast %0 : vector<1x50x21xf32> to vector<50x21xf32>
    %2 = tpu.transpose %1, [1, 0] : vector<50x21xf32> -> vector<21x50xf32>
    %3 = vector.extract_strided_slice %2 {offsets = [0, 0], sizes = [17, 50], strides = [1, 1]} : vector<21x50xf32> to vector<17x50xf32>
    %4 = vector.extract_strided_slice %2 {offsets = [1, 0], sizes = [17, 50], strides = [1, 1]} : vector<21x50xf32> to vector<17x50xf32>
    %5 = vector.extract_strided_slice %2 {offsets = [2, 0], sizes = [17, 50], strides = [1, 1]} : vector<21x50xf32> to vector<17x50xf32>
    %6 = vector.extract_strided_slice %2 {offsets = [3, 0], sizes = [17, 50], strides = [1, 1]} : vector<21x50xf32> to vector<17x50xf32>
    %7 = vector.extract_strided_slice %2 {offsets = [4, 0], sizes = [17, 50], strides = [1, 1]} : vector<21x50xf32> to vector<17x50xf32>
    %8 = tpu.concatenate %3, %4, %5, %6, %7 in 1 : vector<17x50xf32>, vector<17x50xf32>, vector<17x50xf32>, vector<17x50xf32>, vector<17x50xf32> -> vector<17x250xf32>
    %c1 = arith.constant 1 : index
    %c0_2 = arith.constant 0 : index
    %c0_3 = arith.constant 0 : index
    %9 = vector.load %arg1[%c1, %c0_2, %c0_3] : memref<2x50x21xf32, #tpu.memory_space<vmem>>, vector<1x50x21xf32>
    %10 = vector.shape_cast %9 : vector<1x50x21xf32> to vector<50x21xf32>
    %11 = tpu.transpose %10, [1, 0] : vector<50x21xf32> -> vector<21x50xf32>
    %12 = vector.extract_strided_slice %11 {offsets = [0, 0], sizes = [17, 50], strides = [1, 1]} : vector<21x50xf32> to vector<17x50xf32>
    %13 = vector.extract_strided_slice %11 {offsets = [1, 0], sizes = [17, 50], strides = [1, 1]} : vector<21x50xf32> to vector<17x50xf32>
    %14 = vector.extract_strided_slice %11 {offsets = [2, 0], sizes = [17, 50], strides = [1, 1]} : vector<21x50xf32> to vector<17x50xf32>
    %15 = vector.extract_strided_slice %11 {offsets = [3, 0], sizes = [17, 50], strides = [1, 1]} : vector<21x50xf32> to vector<17x50xf32>
    %16 = vector.extract_strided_slice %11 {offsets = [4, 0], sizes = [17, 50], strides = [1, 1]} : vector<21x50xf32> to vector<17x50xf32>
    %17 = tpu.concatenate %12, %13, %14, %15, %16 in 1 : vector<17x50xf32>, vector<17x50xf32>, vector<17x50xf32>, vector<17x50xf32>, vector<17x50xf32> -> vector<17x250xf32>
    %18 = tpu.concatenate %8, %17 in 0 : vector<17x250xf32>, vector<17x250xf32> -> vector<34x250xf32>
    %19 = arith.truncf %18 : vector<34x250xf32> to vector<34x250xbf16>
    %c0_4 = arith.constant 0 : index
    %c0_5 = arith.constant 0 : index
    %20 = vector.load %arg2[%c0_4, %c0_5] : memref<250x256xbf16, #tpu.memory_space<vmem>>, vector<250x256xbf16>
    %cst = arith.constant dense<0.000000e+00> : vector<34x256xf32>
    %21 = tpu.matmul %19, %20, %cst {dimension_numbers = #tpu.dot_dimension_numbers<[1], [0], [0], [1], [0, 0, 1, 1], [], []>} : vector<34x250xbf16>, vector<250x256xbf16>, vector<34x256xf32> -> vector<34x256xf32>
    %22 = vector.extract_strided_slice %21 {offsets = [0, 0], sizes = [17, 256], strides = [1, 1]} : vector<34x256xf32> to vector<17x256xf32>
    %cst_6 = arith.constant dense<0xFF800000> : vector<256xf32>
    %23 = vector.multi_reduction <maximumf>, %22, %cst_6 [0] : vector<17x256xf32> to vector<256xf32>
    %24 = vector.shape_cast %23 : vector<256xf32> to vector<1x256xf32>
    %25 = vector.extract_strided_slice %21 {offsets = [17, 0], sizes = [17, 256], strides = [1, 1]} : vector<34x256xf32> to vector<17x256xf32>
    %cst_7 = arith.constant dense<0xFF800000> : vector<256xf32>
    %26 = vector.multi_reduction <maximumf>, %25, %cst_7 [0] : vector<17x256xf32> to vector<256xf32>
    %27 = vector.shape_cast %26 : vector<256xf32> to vector<1x256xf32>
    %28 = tpu.concatenate %24, %27 in 0 : vector<1x256xf32>, vector<1x256xf32> -> vector<2x256xf32>
    %c0_8 = arith.constant 0 : index
    %c0_9 = arith.constant 0 : index
    %29 = vector.load %arg3[%c0_8, %c0_9] : memref<1x256xf32, #tpu.memory_space<vmem>>, vector<1x256xf32>
    %30 = vector.broadcast %29 : vector<1x256xf32> to vector<2x256xf32>
    %31 = arith.addf %28, %30 : vector<2x256xf32>
    %cst_10 = arith.constant 0.000000e+00 : f32
    %32 = vector.broadcast %cst_10 : f32 to vector<2x256xf32>
    %33 = arith.maximumf %31, %32 : vector<2x256xf32>
    %c0_11 = arith.constant 0 : index
    %c0_12 = arith.constant 0 : index
    %34 = vector.load %arg4[%c0_11, %c0_12] : memref<2x256xf32, #tpu.memory_space<vmem>>, vector<2x256xf32>
    tpu.vector_store %arg4[%c0_11, %c0_12], %33 {strides = array<i32>} : memref<2x256xf32, #tpu.memory_space<vmem>>, vector<2x256xf32>,
    return
  }
  func.func @transform_0(%arg0: i32) -> (i32, i32, i32) {
    %c0_i32 = arith.constant 0 : i32
    %c0_i32_0 = arith.constant 0 : i32
    %c0_i32_1 = arith.constant 0 : i32
    return %arg0, %c0_i32, %c0_i32_0 : i32, i32, i32
  }
  func.func @transform_1(%arg0: i32) -> (i32, i32) {
    %c0_i32 = arith.constant 0 : i32
    %c0_i32_0 = arith.constant 0 : i32
    %c0_i32_1 = arith.constant 0 : i32
    return %c0_i32, %c0_i32_0 : i32, i32
  }
  func.func @transform_2(%arg0: i32) -> (i32, i32) {
    %c0_i32 = arith.constant 0 : i32
    %c0_i32_0 = arith.constant 0 : i32
    %c0_i32_1 = arith.constant 0 : i32
    return %c0_i32, %c0_i32_0 : i32, i32
  }
  func.func @transform_3(%arg0: i32) -> (i32, i32) {
    %c0_i32 = arith.constant 0 : i32
    %c0_i32_0 = arith.constant 0 : i32
    return %arg0, %c0_i32 : i32, i32
  }
}

</mosaic_0001>

<llo_original>
// kernel: tpu_custom_call.1
$region0: #{tpu_custom_call.1}
  #allocation0 [shape = 'u32[]', space=smem, size = 0x4, offset = 0x4, fixed_abs, tag = 'smem constant byte address 0x4 - core index']
  #allocation1 [shape = 'u32[144,128]{1,0:T(1,128)}', space=vmem, size = 0x12000, scoped, tag = 'internal scratch']
  %s0 = inlined_call_operand.vmem [shape: f32[2,50,21], index: 0, kind: input, shape index: {}]
  %s1 = inlined_call_operand.hbm [shape: bf16[250,256], index: 1, kind: input, shape index: {}]
  %s2 = inlined_call_operand.vmem [shape: f32[1,256], index: 2, kind: input, shape index: {}]
  %s3 = inlined_call_operand.hbm [shape: f32[2,256], index: 3, kind: output, shape index: {}]
  %s4 = sld [smem:[#allocation0]]
  $region26: #{tpu_custom_call.1} parent=0
    _
  %s6 = ssub.s32 1, %s4
  %s7 = scalar_select 0, %s6, %s4
  $region1: #{tpu_custom_call.1} parent=0
    #allocation2 [shape = 'u8[131072]{0}', space=vmem, size = 0x20000, scoped, tag = 'input window, operand 1, single buffered']
    #allocation3 [shape = 's32[1]{0}', space=sflag, size = 0x4, scoped, tag = 'scoped memory for tpu_custom_call.1']
    #allocation4 [shape = 's32[1]{0}', space=sflag, size = 0x4, scoped, tag = 'scoped memory for tpu_custom_call.1']
    #allocation5 [shape = 'u8[2048]{0}', space=vmem, size = 0x800, scoped, tag = 'output window, operand 0, single buffered']
    %8 = vsyncpa [#allocation3], 0
    %9 = vsyncpa [#allocation4], 0
    // Predicated region
    $region2: #{tpu_custom_call.1} parent=1 // pred_check
      _
    $region3: #{tpu_custom_call.1} parent=1 // pred_check_branch
      %11 = sbr.rel (0) target = $region5
    $region4: #{tpu_custom_call.1} parent=1 // pred_region
      _
    $region5: #{tpu_custom_call.1} parent=1 // pred_fallthru
      _
    // Predicated region
    $region6: #{tpu_custom_call.1} parent=1 // pred_check
      _
    $region7: #{tpu_custom_call.1} parent=1 // pred_check_branch
      %13 = sbr.rel (0) target = $region9
    $region8: #{tpu_custom_call.1} parent=1 // pred_region
      %s15 = ssub.s32 4096, 4096
      %16 = vsyncadd [#allocation3], %s15
      %s17 = sshll.u32 [#allocation2], 4
      %s18 = int_to_ptr.vmem [resolvable:$true] %s17
      %23 = dma.hbm_to_vmem [thread:$0]  %s1, 4096, %s18, [#allocation3], 128, 128, 8
    $region9: #{tpu_custom_call.1} parent=1 // pred_fallthru
      _
    // Predicated region
    $region10: #{tpu_custom_call.1} parent=1 // pred_check
      _
    $region11: #{tpu_custom_call.1} parent=1 // pred_check_branch
      %25 = sbr.rel (0) target = $region13
    $region12: #{tpu_custom_call.1} parent=1 // pred_region
      _
    $region13: #{tpu_custom_call.1} parent=1 // pred_fallthru
      _
    // Predicated region
    $region14: #{tpu_custom_call.1} parent=1 // pred_check
      _
    $region15: #{tpu_custom_call.1} parent=1 // pred_check_branch
      %27 = sbr.rel (0) target = $region17
    $region16: #{tpu_custom_call.1} parent=1 // pred_region
      %28 = dma.done [#allocation3], 4096
    $region17: #{tpu_custom_call.1} parent=1 // pred_fallthru
      _
    %v29 = vld [vmem:[%s0] sm:$0xff]
    %v30 = vld [vmem:[%s0 + $0x8] sm:$0xff]
    %v31 = vld [vmem:[%s0 + $0x10] sm:$0xff]
    %v32 = vld [vmem:[%s0 + $0x18] sm:$0xff]
    %v33 = vld [vmem:[%s0 + $0x20] sm:$0xff]
    %v34 = vld [vmem:[%s0 + $0x28] sm:$0xff]
    %v35 = vld [vmem:[%s0 + $0x30] sm:$0x3]
    %36 = vxpose.xlu0.b32.start [1/16] %v29, 128
    %37 = vxpose.xlu0.b32.cont [2/16] %v30, 128
    %38 = vxpose.xlu0.b32.cont [3/16] %v31, 128
    %39 = vxpose.xlu0.b32.cont [4/16] %v32, 128
    %40 = vxpose.xlu0.b32.cont [5/16] %v33, 128
    %41 = vxpose.xlu0.b32.cont [6/16] %v34, 128
    %42 = vxpose.xlu0.b32.cont [7/16] %v35, 128
    %43 = vxpose.xlu0.b32.cont [8/16] 0.0, 128
    %44 = vxpose.xlu0.b32.cont [9/16] 0.0, 128
    %45 = vxpose.xlu0.b32.cont [10/16] 0.0, 128
    %46 = vxpose.xlu0.b32.cont [11/16] 0.0, 128
    %47 = vxpose.xlu0.b32.cont [12/16] 0.0, 128
    %48 = vxpose.xlu0.b32.cont [13/16] 0.0, 128
    %49 = vxpose.xlu0.b32.cont [14/16] 0.0, 128
    %50 = vxpose.xlu0.b32.cont [15/16] 0.0, 128
    %51 = vxpose.xlu0.b32.end [16/16] 0.0, 128
    %v52 = vpop.trf.xlu0
    %v53 = vpop.trf.xlu0
    %v54 = vpop.trf.xlu0
    %v55 = vpop.trf.xlu0
    %v56 = vpop.trf.xlu0
    %v57 = vpop.trf.xlu0
    %v58 = vpop.trf.xlu0
    %v59 = vpop.trf.xlu0
    %v60 = vpop.trf.xlu0
    %v61 = vpop.trf.xlu0
    %v62 = vpop.trf.xlu0
    %v63 = vpop.trf.xlu0
    %v64 = vpop.trf.xlu0
    %v65 = vpop.trf.xlu0
    %v66 = vpop.trf.xlu0
    %v67 = vpop.trf.xlu0
    %vm71 = vcmask 1046528
    %v72 = vrot.slane %v52, 1
    %v73 = vrot.slane %v53, 1
    %v74 = vsel %vm71, %v72, %v73
    %v75 = vrot.slane %v54, 1
    %v76 = vsel %vm71, %v73, %v75
    %77 = vrot.lane.b32.xlu0 %v74, 50
    %v78 = vpop.permute.xlu0 %77
    %79 = vrot.lane.b32.xlu0 %v76, 50
    %v80 = vpop.permute.xlu0 %79
    %81 = vrot.lane.b32.xlu0 %v75, 50
    %v82 = vpop.permute.xlu0 %81
    %vm86 = vcmask 1045504
    %v87 = vrot.slane %v52, 2
    %v88 = vrot.slane %v53, 2
    %v89 = vsel %vm86, %v87, %v88
    %v90 = vrot.slane %v54, 2
    %v91 = vsel %vm86, %v88, %v90
    %92 = vrot.lane.b32.xlu0 %v89, 100
    %v93 = vpop.permute.xlu0 %92
    %94 = vrot.lane.b32.xlu0 %v91, 100
    %v95 = vpop.permute.xlu0 %94
    %96 = vrot.lane.b32.xlu0 %v90, 100
    %v97 = vpop.permute.xlu0 %96
    %vm101 = vcmask 1044480
    %v102 = vrot.slane %v52, 3
    %v103 = vrot.slane %v53, 3
    %v104 = vsel %vm101, %v102, %v103
    %v105 = vrot.slane %v54, 3
    %v106 = vsel %vm101, %v103, %v105
    %107 = vrot.lane.b32.xlu0 %v104, 22
    %v108 = vpop.permute.xlu0 %107
    %109 = vrot.lane.b32.xlu0 %v106, 22
    %v110 = vpop.permute.xlu0 %109
    %111 = vrot.lane.b32.xlu0 %v105, 22
    %v112 = vpop.permute.xlu0 %111
    %vm116 = vcmask 1043456
    %v117 = vrot.slane %v52, 4
    %v118 = vrot.slane %v53, 4
    %v119 = vsel %vm116, %v117, %v118
    %v120 = vrot.slane %v54, 4
    %v121 = vsel %vm116, %v118, %v120
    %122 = vrot.lane.b32.xlu0 %v119, 72
    %v123 = vpop.permute.xlu0 %122
    %124 = vrot.lane.b32.xlu0 %v121, 72
    %v125 = vpop.permute.xlu0 %124
    %126 = vrot.lane.b32.xlu0 %v120, 72
    %v127 = vpop.permute.xlu0 %126
    %vm131 = vcmask 408576
    %v132 = vsel %vm131, %v52, %v78
    %v133 = vsel %vm131, %v53, %v80
    %v134 = vsel %vm131, %v54, %v82
    %vm135 = vcmask 818176
    %v136 = vsel %vm135, %v132, %v93
    %v137 = vsel %vm135, %v133, %v95
    %v138 = vsel %vm135, %v134, %v97
    %vm139 = vcmask 179200
    %v140 = vsel %vm139, %v93, %v108
    %v141 = vsel %vm139, %v95, %v110
    %v142 = vsel %vm139, %v97, %v112
    %vm143 = vcmask 588800
    %v144 = vsel %vm143, %v140, %v123
    %v145 = vsel %vm143, %v141, %v125
    %v146 = vsel %vm143, %v142, %v127
    %s147 = scalar_lea.vmem %s0, 56
    %v148 = vld [vmem:[%s147] sm:$0xff]
    %v149 = vld [vmem:[%s147 + $0x8] sm:$0xff]
    %v150 = vld [vmem:[%s147 + $0x10] sm:$0xff]
    %v151 = vld [vmem:[%s147 + $0x18] sm:$0xff]
    %v152 = vld [vmem:[%s147 + $0x20] sm:$0xff]
    %v153 = vld [vmem:[%s147 + $0x28] sm:$0xff]
    %v154 = vld [vmem:[%s147 + $0x30] sm:$0x3]
    %155 = vxpose.xlu0.b32.start [1/16] %v148, 128
    %156 = vxpose.xlu0.b32.cont [2/16] %v149, 128
    %157 = vxpose.xlu0.b32.cont [3/16] %v150, 128
    %158 = vxpose.xlu0.b32.cont [4/16] %v151, 128
    %159 = vxpose.xlu0.b32.cont [5/16] %v152, 128
    %160 = vxpose.xlu0.b32.cont [6/16] %v153, 128
    %161 = vxpose.xlu0.b32.cont [7/16] %v154, 128
    %162 = vxpose.xlu0.b32.cont [8/16] 0.0, 128
    %163 = vxpose.xlu0.b32.cont [9/16] 0.0, 128
    %164 = vxpose.xlu0.b32.cont [10/16] 0.0, 128
    %165 = vxpose.xlu0.b32.cont [11/16] 0.0, 128
    %166 = vxpose.xlu0.b32.cont [12/16] 0.0, 128
    %167 = vxpose.xlu0.b32.cont [13/16] 0.0, 128
    %168 = vxpose.xlu0.b32.cont [14/16] 0.0, 128
    %169 = vxpose.xlu0.b32.cont [15/16] 0.0, 128
    %170 = vxpose.xlu0.b32.end [16/16] 0.0, 128
    %v171 = vpop.trf.xlu0
    %v172 = vpop.trf.xlu0
    %v173 = vpop.trf.xlu0
    %v174 = vpop.trf.xlu0
    %v175 = vpop.trf.xlu0
    %v176 = vpop.trf.xlu0
    %v177 = vpop.trf.xlu0
    %v178 = vpop.trf.xlu0
    %v179 = vpop.trf.xlu0
    %v180 = vpop.trf.xlu0
    %v181 = vpop.trf.xlu0
    %v182 = vpop.trf.xlu0
    %v183 = vpop.trf.xlu0
    %v184 = vpop.trf.xlu0
    %v185 = vpop.trf.xlu0
    %v186 = vpop.trf.xlu0
    %v190 = vrot.slane %v171, 1
    %v191 = vrot.slane %v172, 1
    %v192 = vsel %vm71, %v190, %v191
    %v193 = vrot.slane %v173, 1
    %v194 = vsel %vm71, %v191, %v193
    %195 = vrot.lane.b32.xlu0 %v192, 50
    %v196 = vpop.permute.xlu0 %195
    %197 = vrot.lane.b32.xlu0 %v194, 50
    %v198 = vpop.permute.xlu0 %197
    %199 = vrot.lane.b32.xlu0 %v193, 50
    %v200 = vpop.permute.xlu0 %199
    %v204 = vrot.slane %v171, 2
    %v205 = vrot.slane %v172, 2
    %v206 = vsel %vm86, %v204, %v205
    %v207 = vrot.slane %v173, 2
    %v208 = vsel %vm86, %v205, %v207
    %209 = vrot.lane.b32.xlu0 %v206, 100
    %v210 = vpop.permute.xlu0 %209
    %211 = vrot.lane.b32.xlu0 %v208, 100
    %v212 = vpop.permute.xlu0 %211
    %213 = vrot.lane.b32.xlu0 %v207, 100
    %v214 = vpop.permute.xlu0 %213
    %v218 = vrot.slane %v171, 3
    %v219 = vrot.slane %v172, 3
    %v220 = vsel %vm101, %v218, %v219
    %v221 = vrot.slane %v173, 3
    %v222 = vsel %vm101, %v219, %v221
    %223 = vrot.lane.b32.xlu0 %v220, 22
    %v224 = vpop.permute.xlu0 %223
    %225 = vrot.lane.b32.xlu0 %v222, 22
    %v226 = vpop.permute.xlu0 %225
    %227 = vrot.lane.b32.xlu0 %v221, 22
    %v228 = vpop.permute.xlu0 %227
    %v232 = vrot.slane %v171, 4
    %v233 = vrot.slane %v172, 4
    %v234 = vsel %vm116, %v232, %v233
    %v235 = vrot.slane %v173, 4
    %v236 = vsel %vm116, %v233, %v235
    %237 = vrot.lane.b32.xlu0 %v234, 72
    %v238 = vpop.permute.xlu0 %237
    %239 = vrot.lane.b32.xlu0 %v236, 72
    %v240 = vpop.permute.xlu0 %239
    %241 = vrot.lane.b32.xlu0 %v235, 72
    %v242 = vpop.permute.xlu0 %241
    %v246 = vsel %vm131, %v171, %v196
    %v247 = vsel %vm131, %v172, %v198
    %v248 = vsel %vm131, %v173, %v200
    %v249 = vsel %vm135, %v246, %v210
    %v250 = vsel %vm135, %v247, %v212
    %v251 = vsel %vm135, %v248, %v214
    %v252 = vsel %vm139, %v210, %v224
    %v253 = vsel %vm139, %v212, %v226
    %v254 = vsel %vm139, %v214, %v228
    %v255 = vsel %vm143, %v252, %v238
    %v256 = vsel %vm143, %v253, %v240
    %v257 = vsel %vm143, %v254, %v242
    %vm264 = vcmask 1040384
    %v265 = vrot.slane %v249, 7
    %v266 = vrot.slane %v255, 7
    %v267 = vrot.slane %v250, 7
    %v268 = vsel %vm264, %v265, %v267
    %v269 = vrot.slane %v256, 7
    %v270 = vsel %vm264, %v266, %v269
    %v271 = vrot.slane %v251, 7
    %v272 = vsel %vm264, %v267, %v271
    %v273 = vrot.slane %v257, 7
    %v274 = vsel %vm264, %v269, %v273
    %v281 = vsel %vm264, %v138, %v265
    %v282 = vsel %vm264, %v146, %v266
    %v283 = vpack.c.bf16 %v137, %v136
    %v284 = vpack.c.bf16 %v145, %v144
    %v285 = vpack.c.bf16 %v268, %v281
    %v286 = vpack.c.bf16 %v270, %v282
    %v287 = vpack.c.bf16 %v272, %v272
    %v288 = vpack.c.bf16 %v274, %v274
    %v289 = vld [vmem:[#allocation2] sm:$0xff]
    %v290 = vld [vmem:[#allocation2 + $0x8] sm:$0xff]
    %v291 = vld [vmem:[#allocation2 + $0x10] sm:$0xff]
    %v292 = vld [vmem:[#allocation2 + $0x18] sm:$0xff]
    %v293 = vld [vmem:[#allocation2 + $0x20] sm:$0xff]
    %v294 = vld [vmem:[#allocation2 + $0x28] sm:$0xff]
    %v295 = vld [vmem:[#allocation2 + $0x30] sm:$0xff]
    %v296 = vld [vmem:[#allocation2 + $0x38] sm:$0xff]
    %v297 = vld [vmem:[#allocation2 + $0x40] sm:$0xff]
    %v298 = vld [vmem:[#allocation2 + $0x48] sm:$0xff]
    %v299 = vld [vmem:[#allocation2 + $0x50] sm:$0xff]
    %v300 = vld [vmem:[#allocation2 + $0x58] sm:$0xff]
    %v301 = vld [vmem:[#allocation2 + $0x60] sm:$0xff]
    %v302 = vld [vmem:[#allocation2 + $0x68] sm:$0xff]
    %v303 = vld [vmem:[#allocation2 + $0x70] sm:$0xff]
    %v304 = vld [vmem:[#allocation2 + $0x78] sm:$0xff]
    %v305 = vld [vmem:[#allocation2 + $0x80] sm:$0xff]
    %v306 = vld [vmem:[#allocation2 + $0x88] sm:$0xff]
    %v307 = vld [vmem:[#allocation2 + $0x90] sm:$0xff]
    %v308 = vld [vmem:[#allocation2 + $0x98] sm:$0xff]
    %v309 = vld [vmem:[#allocation2 + $0xa0] sm:$0xff]
    %v310 = vld [vmem:[#allocation2 + $0xa8] sm:$0xff]
    %v311 = vld [vmem:[#allocation2 + $0xb0] sm:$0xff]
    %v312 = vld [vmem:[#allocation2 + $0xb8] sm:$0xff]
    %v313 = vld [vmem:[#allocation2 + $0xc0] sm:$0xff]
    %v314 = vld [vmem:[#allocation2 + $0xc8] sm:$0xff]
    %v315 = vld [vmem:[#allocation2 + $0xd0] sm:$0xff]
    %v316 = vld [vmem:[#allocation2 + $0xd8] sm:$0xff]
    %v317 = vld [vmem:[#allocation2 + $0xe0] sm:$0xff]
    %v318 = vld [vmem:[#allocation2 + $0xe8] sm:$0xff]
    %v319 = vld [vmem:[#allocation2 + $0xf0] sm:$0xff]
    %v320 = vld [vmem:[#allocation2 + $0xf8] sm:$0x11]
    %v353 = vunpack.c.l.b16 %v289
    %v354 = vunpack.c.h.b16 %v289
    %v355 = vunpack.c.l.b16 %v290
    %v356 = vunpack.c.h.b16 %v290
    %v357 = vunpack.c.l.b16 %v291
    %v358 = vunpack.c.h.b16 %v291
    %v359 = vunpack.c.l.b16 %v292
    %v360 = vunpack.c.h.b16 %v292
    %v361 = vunpack.c.l.b16 %v293
    %v362 = vunpack.c.h.b16 %v293
    %v363 = vunpack.c.l.b16 %v294
    %v364 = vunpack.c.h.b16 %v294
    %v365 = vunpack.c.l.b16 %v295
    %v366 = vunpack.c.h.b16 %v295
    %v367 = vunpack.c.l.b16 %v296
    %v368 = vunpack.c.h.b16 %v296
    %v369 = vunpack.c.l.b16 %v297
    %v370 = vunpack.c.h.b16 %v297
    %v371 = vunpack.c.l.b16 %v298
    %v372 = vunpack.c.h.b16 %v298
    %v373 = vunpack.c.l.b16 %v299
    %v374 = vunpack.c.h.b16 %v299
    %v375 = vunpack.c.l.b16 %v300
    %v376 = vunpack.c.h.b16 %v300
    %v377 = vunpack.c.l.b16 %v301
    %v378 = vunpack.c.h.b16 %v301
    %v379 = vunpack.c.l.b16 %v302
    %v380 = vunpack.c.h.b16 %v302
    %v381 = vunpack.c.l.b16 %v303
    %v382 = vunpack.c.h.b16 %v303
    %v383 = vunpack.c.l.b16 %v304
    %v384 = vunpack.c.h.b16 %v304
    %v385 = vunpack.c.l.b16 %v305
    %v386 = vunpack.c.h.b16 %v305
    %v387 = vunpack.c.l.b16 %v306
    %v388 = vunpack.c.h.b16 %v306
    %v389 = vunpack.c.l.b16 %v307
    %v390 = vunpack.c.h.b16 %v307
    %v391 = vunpack.c.l.b16 %v308
    %v392 = vunpack.c.h.b16 %v308
    %v393 = vunpack.c.l.b16 %v309
    %v394 = vunpack.c.h.b16 %v309
    %v395 = vunpack.c.l.b16 %v310
    %v396 = vunpack.c.h.b16 %v310
    %v397 = vunpack.c.l.b16 %v311
    %v398 = vunpack.c.h.b16 %v311
    %v399 = vunpack.c.l.b16 %v312
    %v400 = vunpack.c.h.b16 %v312
    %v401 = vunpack.c.l.b16 %v313
    %v402 = vunpack.c.h.b16 %v313
    %v403 = vunpack.c.l.b16 %v314
    %v404 = vunpack.c.h.b16 %v314
    %v405 = vunpack.c.l.b16 %v315
    %v406 = vunpack.c.h.b16 %v315
    %v407 = vunpack.c.l.b16 %v316
    %v408 = vunpack.c.h.b16 %v316
    %v409 = vunpack.c.l.b16 %v317
    %v410 = vunpack.c.h.b16 %v317
    %v411 = vunpack.c.l.b16 %v318
    %v412 = vunpack.c.h.b16 %v318
    %v413 = vunpack.c.l.b16 %v319
    %v414 = vunpack.c.h.b16 %v319
    %v415 = vunpack.c.l.b16 %v320
    %v416 = vunpack.c.h.b16 %v320
    %v417 = vpack.c.b16 %v355, %v353
    %v418 = vpack.c.b16 %v356, %v354
    %v419 = vpack.c.b16 %v359, %v357
    %v420 = vpack.c.b16 %v360, %v358
    %v421 = vpack.c.b16 %v363, %v361
    %v422 = vpack.c.b16 %v364, %v362
    %v423 = vpack.c.b16 %v367, %v365
    %v424 = vpack.c.b16 %v368, %v366
    %v425 = vpack.c.b16 %v371, %v369
    %v426 = vpack.c.b16 %v372, %v370
    %v427 = vpack.c.b16 %v375, %v373
    %v428 = vpack.c.b16 %v376, %v374
    %v429 = vpack.c.b16 %v379, %v377
    %v430 = vpack.c.b16 %v380, %v378
    %v431 = vpack.c.b16 %v383, %v381
    %v432 = vpack.c.b16 %v384, %v382
    %v433 = vpack.c.b16 %v387, %v385
    %v434 = vpack.c.b16 %v388, %v386
    %v435 = vpack.c.b16 %v391, %v389
    %v436 = vpack.c.b16 %v392, %v390
    %v437 = vpack.c.b16 %v395, %v393
    %v438 = vpack.c.b16 %v396, %v394
    %v439 = vpack.c.b16 %v399, %v397
    %v440 = vpack.c.b16 %v400, %v398
    %v441 = vpack.c.b16 %v403, %v401
    %v442 = vpack.c.b16 %v404, %v402
    %v443 = vpack.c.b16 %v407, %v405
    %v444 = vpack.c.b16 %v408, %v406
    %v445 = vpack.c.b16 %v411, %v409
    %v446 = vpack.c.b16 %v412, %v410
    %v447 = vpack.c.b16 %v415, %v413
    %v448 = vpack.c.b16 %v416, %v414
    %vm479 = vcmask 998400
    %v481 = vsel %vm479, %v284, 0
    %v484 = vsel %vm479, %v286, 0
    %v487 = vsel %vm479, %v288, 0
    %v490 = vsel %vm101, %v447, 0
    %v493 = vsel %vm101, %v448, 0
    %495 = vmatprep.subr.bf16.mxu0 %v432
    %496 = vmatpush1.bf16.msra.mxu0 %v431
    %497 = vmatprep.subr.bf16.mxu0 %v430
    %498 = vmatpush1.bf16.msra.mxu0 %v429
    %499 = vmatprep.subr.bf16.mxu0 %v428
    %500 = vmatpush1.bf16.msra.mxu0 %v427
    %501 = vmatprep.subr.bf16.mxu0 %v426
    %502 = vmatpush1.bf16.msra.mxu0 %v425
    %503 = vmatprep.subr.bf16.mxu0 %v424
    %504 = vmatpush1.bf16.msra.mxu0 %v423
    %505 = vmatprep.subr.bf16.mxu0 %v422
    %506 = vmatpush1.bf16.msra.mxu0 %v421
    %507 = vmatprep.subr.bf16.mxu0 %v420
    %508 = vmatpush1.bf16.msra.mxu0 %v419
    %509 = vmatprep.subr.bf16.mxu0 %v418
    %510 = vmatpush1.bf16.msra.mxu0 %v417
    %511 = vmatprep.subr.bf16.mxu0 %v493
    %512 = vmatpush2.bf16.msra.mxu0 %v490
    %513 = vmatprep.subr.bf16.mxu0 %v446
    %514 = vmatpush2.bf16.msra.mxu0 %v445
    %515 = vmatprep.subr.bf16.mxu0 %v444
    %516 = vmatpush2.bf16.msra.mxu0 %v443
    %517 = vmatprep.subr.bf16.mxu0 %v442
    %518 = vmatpush2.bf16.msra.mxu0 %v441
    %519 = vmatprep.subr.bf16.mxu0 %v440
    %520 = vmatpush2.bf16.msra.mxu0 %v439
    %521 = vmatprep.subr.bf16.mxu0 %v438
    %522 = vmatpush2.bf16.msra.mxu0 %v437
    %523 = vmatprep.subr.bf16.mxu0 %v436
    %524 = vmatpush2.bf16.msra.mxu0 %v435
    %525 = vmatprep.subr.bf16.mxu0 %v434
    %526 = vmatpush2.bf16.msra.mxu0 %v433
    %527 = vmatprep.mubr.bf16.mxu0 %v481
    %528 = vmatmul.mubr.bf16.gmra.mxu0 %v283
    %v529 = vpop.f32.mrf.mxu0
    %v530 = vadd.f32 0.0, %v529
    %v531 = vpop.f32.mrf.mxu0
    %v532 = vadd.f32 0.0, %v531
    %v533 = vpop.f32.mrf.mxu0
    %v534 = vadd.f32 0.0, %v533
    %v535 = vpop.f32.mrf.mxu0
    %v536 = vadd.f32 0.0, %v535
    %537 = vmatprep.mubr.bf16.mxu0 %v484
    %538 = vmatmul.mubr.bf16.gmra.mxu0 %v285
    %v539 = vpop.f32.mrf.mxu0
    %v540 = vadd.f32 0.0, %v539
    %v541 = vpop.f32.mrf.mxu0
    %v542 = vadd.f32 0.0, %v541
    %v543 = vpop.f32.mrf.mxu0
    %v544 = vadd.f32 0.0, %v543
    %v545 = vpop.f32.mrf.mxu0
    %v546 = vadd.f32 0.0, %v545
    %547 = vmatprep.mubr.bf16.mxu0 %v487
    %548 = vmatmul.mubr.bf16.gmra.mxu0 %v287
    %v549 = vpop.f32.mrf.mxu0
    %v550 = vadd.f32 0.0, %v549
    %v551 = vpop.f32.mrf.mxu0
    %v552 = vadd.f32 0.0, %v551
    %v553 = vpop.f32.mrf.mxu0
    %v554 = vpop.f32.mrf.mxu0
    %555 = vdwg.mxu0
    %v556 = vsel %vm264, %v540, -inf
    %v557 = vmax.f32 %v530, %v556
    %v558 = vmax.f32 %v557, %v534
    %v559 = vrot.slane %v558, 4
    %v560 = vmax.f32 %v558, %v559
    %v561 = vrot.slane %v560, 2
    %v562 = vmax.f32 %v560, %v561
    %v563 = vrot.slane %v562, 1
    %v564 = vmax.f32 %v562, %v563
    %v565 = vsel %vm264, %v542, -inf
    %v566 = vmax.f32 %v532, %v565
    %v567 = vmax.f32 %v566, %v536
    %v568 = vrot.slane %v567, 4
    %v569 = vmax.f32 %v567, %v568
    %v570 = vrot.slane %v569, 2
    %v571 = vmax.f32 %v569, %v570
    %v572 = vrot.slane %v571, 1
    %v573 = vmax.f32 %v571, %v572
    %vm574 = vcmask 1047553
    %v575 = vsel %vm574, %v540, -inf
    %vm576 = vcmask 1041408
    %v577 = vsel %vm576, %v550, -inf
    %v578 = vmax.f32 %v575, %v577
    %v579 = vmax.f32 %v578, %v544
    %v580 = vrot.slane %v579, 4
    %v581 = vmax.f32 %v579, %v580
    %v582 = vrot.slane %v581, 2
    %v583 = vmax.f32 %v581, %v582
    %v584 = vrot.slane %v583, 1
    %v585 = vmax.f32 %v583, %v584
    %v586 = vsel %vm574, %v542, -inf
    %v587 = vsel %vm576, %v552, -inf
    %v588 = vmax.f32 %v586, %v587
    %v589 = vmax.f32 %v588, %v546
    %v590 = vrot.slane %v589, 4
    %v591 = vmax.f32 %v589, %v590
    %v592 = vrot.slane %v591, 2
    %v593 = vmax.f32 %v591, %v592
    %v594 = vrot.slane %v593, 1
    %v595 = vmax.f32 %v593, %v594
    %v596 = vsel %vm264, %v564, %v585
    %v597 = vsel %vm264, %v573, %v595
    %v598 = vld [vmem:[%s2] sm:$0x3]
    %v600 = vlaneseq
    %v601 = vshrl.u32 %v600, 7
    %v602 = vsub.s32 0, %v601
    %v603 = vrot.slane %v598, %v602
    %v604 = vlaneseq
    %v605 = vshrl.u32 %v604, 7
    %v606 = vsub.s32 1, %v605
    %v607 = vrot.slane %v598, %v606
    %v610 = vadd.f32 %v596, %v603
    %v611 = vadd.f32 %v597, %v607
    %v612 = vmax.f32 %v610, 0.0
    %v613 = vmax.f32 %v611, 0.0
    %v616 = vcombine.low %v612, %v613
    %v618 = vunpack.c.l.s4 1983009808
    %v619 = vunpack.c.0.s8 %v618
    %v620 = vlaneseq
    %v621 = vshrl.u32 %v620, 7
    %v622 = vsub.s32 %v619, %v621
    %v623 = vrot.slane %v616, %v622
    %625 = vst [vmem:[#allocation5] sm:$0xf] %v623
    // Predicated region
    $region18: #{tpu_custom_call.1} parent=1 // pred_check
      _
    $region19: #{tpu_custom_call.1} parent=1 // pred_check_branch
      %627 = sbr.rel (0) target = $region21
    $region20: #{tpu_custom_call.1} parent=1 // pred_region
      %s629 = ssub.s32 64, 64
      %630 = vsyncadd [#allocation4], %s629
      %s632 = sshll.u32 [#allocation5], 4
      %s633 = int_to_ptr.vmem [resolvable:$true] %s632
      %635 = dma.vmem_to_hbm [thread:$0]  %s633, 64, %s3, [#allocation4]
    $region21: #{tpu_custom_call.1} parent=1 // pred_fallthru
      _
    // Predicated region
    $region22: #{tpu_custom_call.1} parent=1 // pred_check
      _
    $region23: #{tpu_custom_call.1} parent=1 // pred_check_branch
      %637 = sbr.rel (0) target = $region25
    $region24: #{tpu_custom_call.1} parent=1 // pred_region
      %638 = dma.done [#allocation4], 64
    $region25: #{tpu_custom_call.1} parent=1 // pred_fallthru
      _
    %639 = vsyncpa [#allocation3], 1
    %640 = vsyncpa [#allocation4], 1

</llo_original>
